<compile_context>
chip_gen: v6e
topology: v6e:2x2x1
jax: 0.10.0
libtpu: 0.0.40
codegen_flags: <defaults>
</compile_context>

<pallas_src>
import math

import jax
import jax.numpy as jnp
from jax import lax
from jax.experimental import pallas as pl
from jax.experimental.pallas import tpu as pltpu


# ---------------------------------------------------------------------------
# Parameter init / one-time fusion (outside the hot path).
# ---------------------------------------------------------------------------

def init_lstm_params(key, in_features, out_features):
    """Matches the PyTorch module: Uniform(-sqrt(1/out), sqrt(1/out))."""
    bound = math.sqrt(1.0 / out_features)
    names = ["Wi", "Ui", "Wf", "Uf", "Wg", "Ug", "Wo", "Uo"]
    keys = jax.random.split(key, len(names))
    params = {}
    for name, k in zip(names, keys):
        cols = in_features if name.startswith("W") else out_features
        params[name] = jax.random.uniform(
            k, (out_features, cols), jnp.float32, minval=-bound, maxval=bound)
    return params


def fuse_lstm_params(params, dtype=jnp.float32):
    """Pre-transpose + concatenate the 8 gate matrices ONCE.

    Returns:
      w_cat: (in_features, 4*out_features)  == [Wi.T | Wf.T | Wg.T | Wo.T]
      u_cat: (out_features, 4*out_features) == [Ui.T | Uf.T | Ug.T | Uo.T]
    Gate order along the fused axis: i, f, g, o.  With out_features = 32 the
    fused axis is 128 lanes -> full-lane vregs out of the MXU.
    `dtype=jnp.bfloat16` selects the bf16 MXU path (accumulation stays f32).
    """
    w_cat = jnp.concatenate(
        [params["Wi"].T, params["Wf"].T, params["Wg"].T, params["Wo"].T], axis=1)
    u_cat = jnp.concatenate(
        [params["Ui"].T, params["Uf"].T, params["Ug"].T, params["Uo"].T], axis=1)
    return w_cat.astype(dtype), u_cat.astype(dtype)


def _activate_gates(z, H):
    """sigmoid on i/f/o lanes, tanh on the g lanes, on the full (B,4H) vreg."""
    lane = lax.broadcasted_iota(jnp.int32, z.shape, 1)
    is_g = (lane >= 2 * H) & (lane < 3 * H)
    a = jnp.where(is_g, jnp.tanh(z), jax.nn.sigmoid(z))
    i = a[:, 0 * H:1 * H]
    f = a[:, 1 * H:2 * H]
    g = a[:, 2 * H:3 * H]
    o = a[:, 3 * H:4 * H]
    return i, f, g, o


# ---------------------------------------------------------------------------
# Single-step kernel (single-step inference only; sequences go through the
# whole-sequence kernel below).
# ---------------------------------------------------------------------------

def _lstm_cell_kernel(x_ref, h_ref, c_ref, w_ref, u_ref, h_out_ref, c_out_ref):
    h_prev = h_ref[...]
    c_prev = c_ref[...]

    # Fused gate pre-activations: (B, 4H). 2 MXU pushes, f32 accumulation.
    z = (jnp.dot(x_ref[...].astype(w_ref.dtype), w_ref[...],
                 preferred_element_type=jnp.float32)
         + jnp.dot(h_prev.astype(u_ref.dtype), u_ref[...],
                   preferred_element_type=jnp.float32))

    H = h_prev.shape[-1]
    i, f, g, o = _activate_gates(z, H)

    c_new = f * c_prev + i * g
    # NOTE: faithful to the reference module: tanh(c_prev), NOT tanh(c_new).
    h_new = o * jnp.tanh(c_prev)

    h_out_ref[...] = h_new
    c_out_ref[...] = c_new


def lstm_cell_forward(x, state, fused_params):
    """Single LSTM-cell step.  x: (B, in_features); state: (h, c) or None."""
    w_cat, u_cat = fused_params
    B = x.shape[0]
    H = u_cat.shape[0]

    if state is None:
        h_prev = jnp.zeros((B, H), jnp.float32)
        c_prev = jnp.zeros((B, H), jnp.float32)
    else:
        h_prev, c_prev = state

    vmem = pl.BlockSpec(memory_space=pltpu.MemorySpace.VMEM)
    h_new, c_new = pl.pallas_call(
        _lstm_cell_kernel,
        out_shape=(jax.ShapeDtypeStruct((B, H), jnp.float32),
                   jax.ShapeDtypeStruct((B, H), jnp.float32)),
        in_specs=[vmem] * 5,
        out_specs=(vmem, vmem),
    )(x, h_prev, c_prev, w_cat, u_cat)
    return h_new, c_new


# ---------------------------------------------------------------------------
# Whole-sequence kernel: ONE pallas_call, no grid.
#   Phase 1: xW for all timesteps in one big MXU matmul (VMEM scratch).
#   Phase 2: unrolled fori_loop over T, one recurrent matmul per step,
#            h_seq written into the VMEM-resident output, c_T written once.
# ---------------------------------------------------------------------------

def _lstm_seq_kernel(x_ref, h0_ref, c0_ref, w_ref, u_ref,
                     h_seq_ref, cT_ref, xw_scr):
    T, B, H = h_seq_ref.shape

    # Phase 1: input projection for ALL timesteps, one (T*B, K) x (K, 4H) dot.
    xw_scr[...] = jnp.dot(x_ref[...].astype(w_ref.dtype), w_ref[...],
                          preferred_element_type=jnp.float32)

    u = u_ref[...]   # hoisted; stays in vregs across the unrolled loop

    def step(t, carry):
        h_prev, c_prev = carry
        row = pl.multiple_of(t * B, B)
        xw_t = xw_scr[pl.ds(row, B), :]                       # (B, 4H)
        z = xw_t + jnp.dot(h_prev.astype(u.dtype), u,
                           preferred_element_type=jnp.float32)

        i, f, g, o = _activate_gates(z, H)
        c_new = f * c_prev + i * g
        h_new = o * jnp.tanh(c_prev)   # faithful: OLD cell state

        h_seq_ref[t] = h_new
        return h_new, c_new

    _, c_T = lax.fori_loop(0, T, step, (h0_ref[...], c0_ref[...]), unroll=True)
    cT_ref[...] = c_T


def lstm_sequence_forward(x_seq, state, fused_params):
    """Run the cell over a sequence x_seq: (T, B, in_features).

    Returns (h_seq (T,B,H), (h_T, c_T)).
    """
    w_cat, u_cat = fused_params
    T, B, K_in = x_seq.shape
    H = u_cat.shape[0]

    if state is None:
        h0 = jnp.zeros((B, H), jnp.float32)
        c0 = jnp.zeros((B, H), jnp.float32)
    else:
        h0, c0 = state

    x_flat = x_seq.reshape(T * B, K_in)   # free reshape, done once outside

    vmem = pl.BlockSpec(memory_space=pltpu.MemorySpace.VMEM)
    h_seq, c_T = pl.pallas_call(
        _lstm_seq_kernel,
        out_shape=(jax.ShapeDtypeStruct((T, B, H), jnp.float32),
                   jax.ShapeDtypeStruct((B, H), jnp.float32)),
        in_specs=[vmem] * 5,
        out_specs=(vmem, vmem),
        scratch_shapes=[pltpu.VMEM((T * B, 4 * H), jnp.float32)],  # xW buffer
    )(x_flat, h0, c0, w_cat, u_cat)

    return h_seq, (h_seq[-1], c_T)


# ---------------------------------------------------------------------------
# Pure-JAX reference mirroring the PyTorch forward exactly.
# ---------------------------------------------------------------------------

def _reference_cell(x, h_prev, c_prev, params):
    i = jax.nn.sigmoid(x @ params["Wi"].T + h_prev @ params["Ui"].T)
    f = jax.nn.sigmoid(x @ params["Wf"].T + h_prev @ params["Uf"].T)
    g = jnp.tanh(x @ params["Wg"].T + h_prev @ params["Ug"].T)
    o = jax.nn.sigmoid(x @ params["Wo"].T + h_prev @ params["Uo"].T)
    c = f * c_prev + i * g
    h = o * jnp.tanh(c_prev)   # reference uses the OLD cell state
    return h, c


if __name__ == "__main__":
    key = jax.random.PRNGKey(0)
    k_param, k_x, k_h, k_c, k_xs = jax.random.split(key, 5)

    batch = 8
    in_features = 16
    out_features = 32   # 4*H = 128 -> lane-dense fused gates
    seq_len = 8

    params = init_lstm_params(k_param, in_features, out_features)
    fused_f32 = fuse_lstm_params(params)                       # f32 MXU path
    fused_bf16 = fuse_lstm_params(params, dtype=jnp.bfloat16)  # bf16 MXU path

    x = jax.random.normal(k_x, (batch, in_features), jnp.float32)
    h0 = jax.random.normal(k_h, (batch, out_features), jnp.float32)
    c0 = jax.random.normal(k_c, (batch, out_features), jnp.float32)
    x_seq = jax.random.normal(k_xs, (seq_len, batch, in_features), jnp.float32)

    # --- single-step kernel (both code paths) ---
    h1, c1 = lstm_cell_forward(x, (h0, c0), fused_f32)
    h2, c2 = lstm_cell_forward(x, None, fused_f32)

    # --- whole-sequence kernel, f32 and bf16 MXU operands ---
    h_seq, (hT, cT) = lstm_sequence_forward(x_seq, (h0, c0), fused_f32)
    h_seq_bf, (hT_bf, cT_bf) = lstm_sequence_forward(x_seq, (h0, c0), fused_bf16)

    jax.block_until_ready((h1, c1, h2, c2, h_seq, hT, cT, h_seq_bf, hT_bf, cT_bf))

    # --- numerical checks against pure-JAX reference of the PyTorch semantics ---
    hr1, cr1 = _reference_cell(x, h0, c0, params)
    hr2, cr2 = _reference_cell(x, jnp.zeros_like(h0), jnp.zeros_like(c0), params)
    assert jnp.allclose(h1, hr1, atol=1e-5), "h mismatch (with state)"
    assert jnp.allclose(c1, cr1, atol=1e-5), "c mismatch (with state)"
    assert jnp.allclose(h2, hr2, atol=1e-5), "h mismatch (state=None)"
    assert jnp.allclose(c2, cr2, atol=1e-5), "c mismatch (state=None)"

    h_ref, c_ref = h0, c0
    for t in range(seq_len):
        h_ref, c_ref = _reference_cell(x_seq[t], h_ref, c_ref, params)
        assert jnp.allclose(h_seq[t], h_ref, atol=1e-5), f"h mismatch (seq t={t})"
        assert jnp.allclose(h_seq_bf[t], h_ref, atol=5e-2), f"bf16 h mismatch (t={t})"
    assert jnp.allclose(hT, h_ref, atol=1e-5), "h mismatch (seq final)"
    assert jnp.allclose(cT, c_ref, atol=1e-5), "c mismatch (seq final)"
    assert jnp.allclose(hT_bf, h_ref, atol=5e-2), "bf16 h mismatch (seq final)"
    assert jnp.allclose(cT_bf, c_ref, atol=5e-2), "bf16 c mismatch (seq final)"

    print("KERNEL_OK")
</pallas_src>

<mosaic_0001>
module attributes {stable_mosaic.version = 11 : i64} {
  func.func @_lstm_cell_kernel(%arg0: memref<8x16xf32, #tpu.memory_space<vmem>>, %arg1: memref<8x32xf32, #tpu.memory_space<vmem>>, %arg2: memref<8x32xf32, #tpu.memory_space<vmem>>, %arg3: memref<16x128xf32, #tpu.memory_space<vmem>>, %arg4: memref<32x128xf32, #tpu.memory_space<vmem>>, %arg5: memref<8x32xf32, #tpu.memory_space<vmem>>, %arg6: memref<8x32xf32, #tpu.memory_space<vmem>>) attributes {dimension_semantics = [], scalar_prefetch = 0 : i64, scratch_operands = 0 : i64, tpu.core_type = #tpu.core_type<tc>} {
    %c0 = arith.constant 0 : index
    %c0_0 = arith.constant 0 : index
    %0 = vector.load %arg1[%c0, %c0_0] : memref<8x32xf32, #tpu.memory_space<vmem>>, vector<8x32xf32>
    %c0_1 = arith.constant 0 : index
    %c0_2 = arith.constant 0 : index
    %1 = vector.load %arg2[%c0_1, %c0_2] : memref<8x32xf32, #tpu.memory_space<vmem>>, vector<8x32xf32>
    %c0_3 = arith.constant 0 : index
    %c0_4 = arith.constant 0 : index
    %2 = vector.load %arg0[%c0_3, %c0_4] : memref<8x16xf32, #tpu.memory_space<vmem>>, vector<8x16xf32>
    %c0_5 = arith.constant 0 : index
    %c0_6 = arith.constant 0 : index
    %3 = vector.load %arg3[%c0_5, %c0_6] : memref<16x128xf32, #tpu.memory_space<vmem>>, vector<16x128xf32>
    %cst = arith.constant dense<0.000000e+00> : vector<8x128xf32>
    %4 = tpu.matmul %2, %3, %cst {dimension_numbers = #tpu.dot_dimension_numbers<[1], [0], [0], [1], [0, 0, 1, 1], [], []>} : vector<8x16xf32>, vector<16x128xf32>, vector<8x128xf32> -> vector<8x128xf32>
    %c0_7 = arith.constant 0 : index
    %c0_8 = arith.constant 0 : index
    %5 = vector.load %arg4[%c0_7, %c0_8] : memref<32x128xf32, #tpu.memory_space<vmem>>, vector<32x128xf32>
    %cst_9 = arith.constant dense<0.000000e+00> : vector<8x128xf32>
    %6 = tpu.matmul %0, %5, %cst_9 {dimension_numbers = #tpu.dot_dimension_numbers<[1], [0], [0], [1], [0, 0, 1, 1], [], []>} : vector<8x32xf32>, vector<32x128xf32>, vector<8x128xf32> -> vector<8x128xf32>
    %7 = arith.addf %4, %6 : vector<8x128xf32>
    %8 = tpu.iota {dimensions = array<i32: 1>} : vector<8x128xi32>
    %c64_i32 = arith.constant 64 : i32
    %9 = vector.broadcast %c64_i32 : i32 to vector<8x128xi32>
    %10 = arith.cmpi sge, %8, %9 : vector<8x128xi32>
    %c96_i32 = arith.constant 96 : i32
    %11 = vector.broadcast %c96_i32 : i32 to vector<8x128xi32>
    %12 = arith.cmpi slt, %8, %11 : vector<8x128xi32>
    %13 = arith.andi %10, %12 : vector<8x128xi1>
    %14 = math.tanh %7 : vector<8x128xf32>
    %15 = arith.negf %7 : vector<8x128xf32>
    %16 = math.exp %15 : vector<8x128xf32>
    %cst_10 = arith.constant 1.000000e+00 : f32
    %17 = vector.broadcast %cst_10 : f32 to vector<8x128xf32>
    %18 = arith.addf %17, %16 : vector<8x128xf32>
    %19 = arith.divf %17, %18 : vector<8x128xf32>
    %20 = arith.select %13, %14, %19 : vector<8x128xi1>, vector<8x128xf32>
    %21 = vector.extract_strided_slice %20 {offsets = [0, 0], sizes = [8, 32], strides = [1, 1]} : vector<8x128xf32> to vector<8x32xf32>
    %22 = vector.extract_strided_slice %20 {offsets = [0, 32], sizes = [8, 32], strides = [1, 1]} : vector<8x128xf32> to vector<8x32xf32>
    %23 = vector.extract_strided_slice %20 {offsets = [0, 64], sizes = [8, 32], strides = [1, 1]} : vector<8x128xf32> to vector<8x32xf32>
    %24 = vector.extract_strided_slice %20 {offsets = [0, 96], sizes = [8, 32], strides = [1, 1]} : vector<8x128xf32> to vector<8x32xf32>
    %25 = arith.mulf %22, %1 : vector<8x32xf32>
    %26 = arith.mulf %21, %23 : vector<8x32xf32>
    %27 = arith.addf %25, %26 : vector<8x32xf32>
    %28 = math.tanh %1 : vector<8x32xf32>
    %29 = arith.mulf %24, %28 : vector<8x32xf32>
    %c0_11 = arith.constant 0 : index
    %c0_12 = arith.constant 0 : index
    %30 = vector.load %arg5[%c0_11, %c0_12] : memref<8x32xf32, #tpu.memory_space<vmem>>, vector<8x32xf32>
    tpu.vector_store %arg5[%c0_11, %c0_12], %29 {strides = array<i32>} : memref<8x32xf32, #tpu.memory_space<vmem>>, vector<8x32xf32>,
    %c0_13 = arith.constant 0 : index
    %c0_14 = arith.constant 0 : index
    %31 = vector.load %arg6[%c0_13, %c0_14] : memref<8x32xf32, #tpu.memory_space<vmem>>, vector<8x32xf32>
    tpu.vector_store %arg6[%c0_13, %c0_14], %27 {strides = array<i32>} : memref<8x32xf32, #tpu.memory_space<vmem>>, vector<8x32xf32>,
    return
  }
}

</mosaic_0001>

<llo_original>
// kernel: tpu_custom_call.1
$region0: #{tpu_custom_call.1}
  #allocation0 [shape = 'u32[]', space=smem, size = 0x4, offset = 0x4, fixed_abs, tag = 'smem constant byte address 0x4 - core index']
  #allocation1 [shape = 'u32[144,128]{1,0:T(1,128)}', space=vmem, size = 0x12000, scoped, tag = 'internal scratch']
  %s0 = inlined_call_operand.hbm [shape: f32[8,16], index: 0, kind: input, shape index: {}]
  %s1 = inlined_call_operand.hbm [shape: f32[8,32], index: 1, kind: input, shape index: {}]
  %s2 = inlined_call_operand.hbm [shape: f32[8,32], index: 2, kind: input, shape index: {}]
  %s3 = inlined_call_operand.hbm [shape: f32[16,128], index: 3, kind: input, shape index: {}]
  %s4 = inlined_call_operand.hbm [shape: f32[32,128], index: 4, kind: input, shape index: {}]
  %s5 = inlined_call_operand.hbm [shape: f32[8,32], index: 5, kind: output, shape index: {0}]
  %s6 = inlined_call_operand.hbm [shape: f32[8,32], index: 6, kind: output, shape index: {1}]
  %7 = xla_tuple %s5, %s6
  %s8 = sld [smem:[#allocation0]]
  $region58: #{tpu_custom_call.1} parent=0
    _
  %s10 = ssub.s32 1, %s8
  %s11 = scalar_select 0, %s10, %s8
  $region1: #{tpu_custom_call.1} parent=0
    #allocation2 [shape = 'u8[4096]{0}', space=vmem, size = 0x1000, scoped, tag = 'input window, operand 0, single buffered']
    #allocation3 [shape = 's32[1]{0}', space=sflag, size = 0x4, scoped, tag = 'scoped memory for tpu_custom_call.1']
    #allocation4 [shape = 's32[1]{0}', space=sflag, size = 0x4, scoped, tag = 'scoped memory for tpu_custom_call.1']
    #allocation5 [shape = 'u8[4096]{0}', space=vmem, size = 0x1000, scoped, tag = 'input window, operand 1, single buffered']
    #allocation6 [shape = 's32[1]{0}', space=sflag, size = 0x4, scoped, tag = 'scoped memory for tpu_custom_call.1']
    #allocation7 [shape = 'u8[4096]{0}', space=vmem, size = 0x1000, scoped, tag = 'input window, operand 2, single buffered']
    #allocation8 [shape = 'u8[8192]{0}', space=vmem, size = 0x2000, scoped, tag = 'input window, operand 3, single buffered']
    #allocation9 [shape = 's32[1]{0}', space=sflag, size = 0x4, scoped, tag = 'scoped memory for tpu_custom_call.1']
    #allocation10 [shape = 'u8[16384]{0}', space=vmem, size = 0x4000, scoped, tag = 'input window, operand 4, single buffered']
    #allocation11 [shape = 'u8[4096]{0}', space=vmem, size = 0x1000, scoped, tag = 'output window, operand 0, single buffered']
    #allocation12 [shape = 'u8[4096]{0}', space=vmem, size = 0x1000, scoped, tag = 'output window, operand 1, single buffered']
    #allocation13 [shape = 's32[1]{0}', space=sflag, size = 0x4, scoped, tag = 'scoped memory for tpu_custom_call.1']
    %12 = vsyncpa [#allocation3], 0
    %13 = vsyncpa [#allocation6], 0
    %14 = vsyncpa [#allocation9], 0
    %15 = vsyncpa [#allocation4], 0
    %16 = vsyncpa [#allocation13], 0
    // Predicated region
    $region2: #{tpu_custom_call.1} parent=1 // pred_check
      _
    $region3: #{tpu_custom_call.1} parent=1 // pred_check_branch
      %18 = sbr.rel (0) target = $region5
    $region4: #{tpu_custom_call.1} parent=1 // pred_region
      %s20 = ssub.s32 128, 128
      %21 = vsyncadd [#allocation3], %s20
      %s23 = sshll.u32 [#allocation2], 4
      %s24 = int_to_ptr.vmem [resolvable:$true] %s23
      %26 = dma.hbm_to_vmem [thread:$0]  %s0, 128, %s24, [#allocation3]
    $region5: #{tpu_custom_call.1} parent=1 // pred_fallthru
      _
    // Predicated region
    $region6: #{tpu_custom_call.1} parent=1 // pred_check
      _
    $region7: #{tpu_custom_call.1} parent=1 // pred_check_branch
      %28 = sbr.rel (0) target = $region9
    $region8: #{tpu_custom_call.1} parent=1 // pred_region
      %s30 = ssub.s32 128, 128
      %31 = vsyncadd [#allocation6], %s30
      %s33 = sshll.u32 [#allocation5], 4
      %s34 = int_to_ptr.vmem [resolvable:$true] %s33
      %36 = dma.hbm_to_vmem [thread:$0]  %s1, 128, %s34, [#allocation6]
    $region9: #{tpu_custom_call.1} parent=1 // pred_fallthru
      _
    // Predicated region
    $region10: #{tpu_custom_call.1} parent=1 // pred_check
      _
    $region11: #{tpu_custom_call.1} parent=1 // pred_check_branch
      %38 = sbr.rel (0) target = $region13
    $region12: #{tpu_custom_call.1} parent=1 // pred_region
      %s40 = ssub.s32 128, 128
      %41 = vsyncadd [#allocation6], %s40
      %s43 = sshll.u32 [#allocation7], 4
      %s44 = int_to_ptr.vmem [resolvable:$true] %s43
      %46 = dma.hbm_to_vmem [thread:$0]  %s2, 128, %s44, [#allocation6]
    $region13: #{tpu_custom_call.1} parent=1 // pred_fallthru
      _
    // Predicated region
    $region14: #{tpu_custom_call.1} parent=1 // pred_check
      _
    $region15: #{tpu_custom_call.1} parent=1 // pred_check_branch
      %48 = sbr.rel (0) target = $region17
    $region16: #{tpu_custom_call.1} parent=1 // pred_region
      %s50 = ssub.s32 256, 256
      %51 = vsyncadd [#allocation9], %s50
      %s52 = sshll.u32 [#allocation8], 4
      %s53 = int_to_ptr.vmem [resolvable:$true] %s52
      %58 = dma.hbm_to_vmem [thread:$0]  %s3, 256, %s53, [#allocation9], 128, 128, 8
    $region17: #{tpu_custom_call.1} parent=1 // pred_fallthru
      _
    // Predicated region
    $region18: #{tpu_custom_call.1} parent=1 // pred_check
      _
    $region19: #{tpu_custom_call.1} parent=1 // pred_check_branch
      %60 = sbr.rel (0) target = $region21
    $region20: #{tpu_custom_call.1} parent=1 // pred_region
      %s62 = ssub.s32 512, 512
      %63 = vsyncadd [#allocation9], %s62
      %s64 = sshll.u32 [#allocation10], 4
      %s65 = int_to_ptr.vmem [resolvable:$true] %s64
      %70 = dma.hbm_to_vmem [thread:$0]  %s4, 512, %s65, [#allocation9], 128, 128, 8
    $region21: #{tpu_custom_call.1} parent=1 // pred_fallthru
      _
    // Predicated region
    $region22: #{tpu_custom_call.1} parent=1 // pred_check
      _
    $region23: #{tpu_custom_call.1} parent=1 // pred_check_branch
      %72 = sbr.rel (0) target = $region25
    $region24: #{tpu_custom_call.1} parent=1 // pred_region
      %73 = dma.done [#allocation3], 128
    $region25: #{tpu_custom_call.1} parent=1 // pred_fallthru
      _
    // Predicated region
    $region26: #{tpu_custom_call.1} parent=1 // pred_check
      _
    $region27: #{tpu_custom_call.1} parent=1 // pred_check_branch
      %75 = sbr.rel (0) target = $region29
    $region28: #{tpu_custom_call.1} parent=1 // pred_region
      %76 = dma.done [#allocation6], 128
    $region29: #{tpu_custom_call.1} parent=1 // pred_fallthru
      _
    // Predicated region
    $region30: #{tpu_custom_call.1} parent=1 // pred_check
      _
    $region31: #{tpu_custom_call.1} parent=1 // pred_check_branch
      %78 = sbr.rel (0) target = $region33
    $region32: #{tpu_custom_call.1} parent=1 // pred_region
      %79 = dma.done [#allocation6], 128
    $region33: #{tpu_custom_call.1} parent=1 // pred_fallthru
      _
    // Predicated region
    $region34: #{tpu_custom_call.1} parent=1 // pred_check
      _
    $region35: #{tpu_custom_call.1} parent=1 // pred_check_branch
      %81 = sbr.rel (0) target = $region37
    $region36: #{tpu_custom_call.1} parent=1 // pred_region
      %82 = dma.done [#allocation9], 256
    $region37: #{tpu_custom_call.1} parent=1 // pred_fallthru
      _
    // Predicated region
    $region38: #{tpu_custom_call.1} parent=1 // pred_check
      _
    $region39: #{tpu_custom_call.1} parent=1 // pred_check_branch
      %84 = sbr.rel (0) target = $region41
    $region40: #{tpu_custom_call.1} parent=1 // pred_region
      %85 = dma.done [#allocation9], 512
    $region41: #{tpu_custom_call.1} parent=1 // pred_fallthru
      _
    %v86 = vld [vmem:[#allocation5] sm:$0xff]
    %v87 = vld [vmem:[#allocation7] sm:$0xff]
    %v88 = vld [vmem:[#allocation2] sm:$0xff]
    %v89 = vld [vmem:[#allocation8] sm:$0xff]
    %v90 = vld [vmem:[#allocation8 + $0x8] sm:$0xff]
    %v91 = vld [vmem:[#allocation10] sm:$0xff]
    %v92 = vld [vmem:[#allocation10 + $0x8] sm:$0xff]
    %v93 = vld [vmem:[#allocation10 + $0x10] sm:$0xff]
    %v94 = vld [vmem:[#allocation10 + $0x18] sm:$0xff]
    %vm95 = vcmask 261120
    %v97 = vsel %vm95, %v86, 0
    %99 = vmatprep.subr.mxu0 0.0
    %100 = vmatpush1.msra.mxu0 0.0
    %101 = vmatprep.subr.mxu0 0.0
    %102 = vmatpush1.msra.mxu0 0.0
    %103 = vmatprep.subr.mxu0 0.0
    %104 = vmatpush1.msra.mxu0 0.0
    %105 = vmatprep.subr.mxu0 0.0
    %106 = vmatpush1.msra.mxu0 0.0
    %107 = vmatprep.subr.mxu0 0.0
    %108 = vmatpush1.msra.mxu0 0.0
    %109 = vmatprep.subr.mxu0 0.0
    %110 = vmatpush1.msra.mxu0 0.0
    %111 = vmatprep.subr.mxu0 0.0
    %112 = vmatpush1.msra.mxu0 0.0
    %113 = vmatprep.subr.mxu0 0.0
    %114 = vmatpush1.msra.mxu0 0.0
    %115 = vmatprep.subr.mxu0 0.0
    %116 = vmatpush1.msra.mxu0 0.0
    %117 = vmatprep.subr.mxu0 0.0
    %118 = vmatpush1.msra.mxu0 0.0
    %119 = vmatprep.subr.mxu0 0.0
    %120 = vmatpush1.msra.mxu0 0.0
    %121 = vmatprep.subr.mxu0 0.0
    %122 = vmatpush1.msra.mxu0 0.0
    %123 = vmatprep.subr.mxu0 0.0
    %124 = vmatpush1.msra.mxu0 %v94
    %125 = vmatprep.subr.mxu0 0.0
    %126 = vmatpush1.msra.mxu0 %v93
    %127 = vmatprep.subr.mxu0 0.0
    %128 = vmatpush1.msra.mxu0 %v92
    %129 = vmatprep.subr.mxu0 0.0
    %130 = vmatpush1.msra.mxu0 %v91
    %131 = vmatprep.subr.mxu0 0.0
    %132 = vmatpush2.msra.mxu0 0.0
    %133 = vmatprep.subr.mxu0 0.0
    %134 = vmatpush2.msra.mxu0 0.0
    %135 = vmatprep.subr.mxu0 0.0
    %136 = vmatpush2.msra.mxu0 0.0
    %137 = vmatprep.subr.mxu0 0.0
    %138 = vmatpush2.msra.mxu0 0.0
    %139 = vmatprep.subr.mxu0 0.0
    %140 = vmatpush2.msra.mxu0 0.0
    %141 = vmatprep.subr.mxu0 0.0
    %142 = vmatpush2.msra.mxu0 0.0
    %143 = vmatprep.subr.mxu0 0.0
    %144 = vmatpush2.msra.mxu0 0.0
    %145 = vmatprep.subr.mxu0 0.0
    %146 = vmatpush2.msra.mxu0 0.0
    %147 = vmatprep.subr.mxu0 0.0
    %148 = vmatpush2.msra.mxu0 0.0
    %149 = vmatprep.subr.mxu0 0.0
    %150 = vmatpush2.msra.mxu0 0.0
    %151 = vmatprep.subr.mxu0 0.0
    %152 = vmatpush2.msra.mxu0 0.0
    %153 = vmatprep.subr.mxu0 0.0
    %154 = vmatpush2.msra.mxu0 0.0
    %155 = vmatprep.subr.mxu0 0.0
    %156 = vmatpush2.msra.mxu0 0.0
    %157 = vmatprep.subr.mxu0 0.0
    %158 = vmatpush2.msra.mxu0 0.0
    %159 = vmatprep.subr.mxu0 0.0
    %160 = vmatpush2.msra.mxu0 0.0
    %161 = vmatprep.subr.mxu0 0.0
    %162 = vmatpush2.msra.mxu0 0.0
    %163 = vmatprep.mubr.f32.mxu0 0.0
    %164 = vmatmul.mubr.f32.gmra.mxu0 %v97
    %v165 = vpop.f32.mrf.mxu0
    %v166 = vadd.f32 0.0, %v165
    %v167 = vpop.f32.mrf.mxu0
    %168 = vdwg.mxu0
    %vm169 = vcmask 130048
    %v171 = vsel %vm169, %v88, 0
    %173 = vmatprep.subr.mxu0 0.0
    %174 = vmatpush1.msra.mxu0 0.0
    %175 = vmatprep.subr.mxu0 0.0
    %176 = vmatpush1.msra.mxu0 0.0
    %177 = vmatprep.subr.mxu0 0.0
    %178 = vmatpush1.msra.mxu0 0.0
    %179 = vmatprep.subr.mxu0 0.0
    %180 = vmatpush1.msra.mxu0 0.0
    %181 = vmatprep.subr.mxu0 0.0
    %182 = vmatpush1.msra.mxu0 0.0
    %183 = vmatprep.subr.mxu0 0.0
    %184 = vmatpush1.msra.mxu0 0.0
    %185 = vmatprep.subr.mxu0 0.0
    %186 = vmatpush1.msra.mxu0 0.0
    %187 = vmatprep.subr.mxu0 0.0
    %188 = vmatpush1.msra.mxu0 0.0
    %189 = vmatprep.subr.mxu0 0.0
    %190 = vmatpush1.msra.mxu0 0.0
    %191 = vmatprep.subr.mxu0 0.0
    %192 = vmatpush1.msra.mxu0 0.0
    %193 = vmatprep.subr.mxu0 0.0
    %194 = vmatpush1.msra.mxu0 0.0
    %195 = vmatprep.subr.mxu0 0.0
    %196 = vmatpush1.msra.mxu0 0.0
    %197 = vmatprep.subr.mxu0 0.0
    %198 = vmatpush1.msra.mxu0 0.0
    %199 = vmatprep.subr.mxu0 0.0
    %200 = vmatpush1.msra.mxu0 0.0
    %201 = vmatprep.subr.mxu0 0.0
    %202 = vmatpush1.msra.mxu0 %v90
    %203 = vmatprep.subr.mxu0 0.0
    %204 = vmatpush1.msra.mxu0 %v89
    %205 = vmatprep.subr.mxu0 0.0
    %206 = vmatpush2.msra.mxu0 0.0
    %207 = vmatprep.subr.mxu0 0.0
    %208 = vmatpush2.msra.mxu0 0.0
    %209 = vmatprep.subr.mxu0 0.0
    %210 = vmatpush2.msra.mxu0 0.0
    %211 = vmatprep.subr.mxu0 0.0
    %212 = vmatpush2.msra.mxu0 0.0
    %213 = vmatprep.subr.mxu0 0.0
    %214 = vmatpush2.msra.mxu0 0.0
    %215 = vmatprep.subr.mxu0 0.0
    %216 = vmatpush2.msra.mxu0 0.0
    %217 = vmatprep.subr.mxu0 0.0
    %218 = vmatpush2.msra.mxu0 0.0
    %219 = vmatprep.subr.mxu0 0.0
    %220 = vmatpush2.msra.mxu0 0.0
    %221 = vmatprep.subr.mxu0 0.0
    %222 = vmatpush2.msra.mxu0 0.0
    %223 = vmatprep.subr.mxu0 0.0
    %224 = vmatpush2.msra.mxu0 0.0
    %225 = vmatprep.subr.mxu0 0.0
    %226 = vmatpush2.msra.mxu0 0.0
    %227 = vmatprep.subr.mxu0 0.0
    %228 = vmatpush2.msra.mxu0 0.0
    %229 = vmatprep.subr.mxu0 0.0
    %230 = vmatpush2.msra.mxu0 0.0
    %231 = vmatprep.subr.mxu0 0.0
    %232 = vmatpush2.msra.mxu0 0.0
    %233 = vmatprep.subr.mxu0 0.0
    %234 = vmatpush2.msra.mxu0 0.0
    %235 = vmatprep.subr.mxu0 0.0
    %236 = vmatpush2.msra.mxu0 0.0
    %237 = vmatprep.mubr.f32.mxu0 0.0
    %238 = vmatmul.mubr.f32.gmra.mxu0 %v171
    %v239 = vpop.f32.mrf.mxu0
    %v240 = vadd.f32 %v166, %v239
    %v241 = vpop.f32.mrf.mxu0
    %242 = vdwg.mxu0
    %v243 = vlaneseq
    %v244 = vand.u32 %v243, 127
    %vm245 = vcmp.ge.s32.totalorder %v244, 64
    %vm246 = vcmp.lt.s32.totalorder %v244, 96
    %vm247 = vmand %vm245, %vm246
    %v248 = vtanh.pop %v240
    %v249 = vxor.u32 %v240, 2147483648
    %v250 = vmul.f32 %v249, 1.442695
    %v251 = vpow.pop %v250
    %v252 = vadd.f32 %v251, 1.0
    %v253 = vrcp.pop %v252
    %v254 = vmul.f32 1.0, %v253
    %v255 = vsel %vm247, %v248, %v254
    %257 = vrot.lane.b32.xlu0 %v87, 32
    %v258 = vpop.permute.xlu0 %257
    %v260 = vmul.f32 %v255, %v258
    %262 = vrot.lane.b32.xlu0 %v255, 64
    %v263 = vpop.permute.xlu0 %262
    %v265 = vmul.f32 %v255, %v263
    %267 = vrot.lane.b32.xlu0 %v265, 32
    %v268 = vpop.permute.xlu0 %267
    %v270 = vadd.f32 %v260, %v268
    %v271 = vtanh.pop %v87
    %273 = vrot.lane.b32.xlu0 %v271, 96
    %v274 = vpop.permute.xlu0 %273
    %v276 = vmul.f32 %v255, %v274
    %278 = vrot.lane.b32.xlu0 %v276, 32
    %v279 = vpop.permute.xlu0 %278
    %281 = vst.msk [vmem:[#allocation11] sm:$0xff] %vm95, %v279
    %283 = vrot.lane.b32.xlu0 %v270, 96
    %v284 = vpop.permute.xlu0 %283
    %286 = vst.msk [vmem:[#allocation12] sm:$0xff] %vm95, %v284
    // Predicated region
    $region42: #{tpu_custom_call.1} parent=1 // pred_check
      _
    $region43: #{tpu_custom_call.1} parent=1 // pred_check_branch
      %288 = sbr.rel (0) target = $region45
    $region44: #{tpu_custom_call.1} parent=1 // pred_region
      %s290 = ssub.s32 128, 128
      %291 = vsyncadd [#allocation4], %s290
      %s293 = sshll.u32 [#allocation11], 4
      %s294 = int_to_ptr.vmem [resolvable:$true] %s293
      %296 = dma.vmem_to_hbm [thread:$0]  %s294, 128, %s5, [#allocation4]
    $region45: #{tpu_custom_call.1} parent=1 // pred_fallthru
      _
    // Predicated region
    $region46: #{tpu_custom_call.1} parent=1 // pred_check
      _
    $region47: #{tpu_custom_call.1} parent=1 // pred_check_branch
      %298 = sbr.rel (0) target = $region49
    $region48: #{tpu_custom_call.1} parent=1 // pred_region
      %s300 = ssub.s32 128, 128
      %301 = vsyncadd [#allocation13], %s300
      %s303 = sshll.u32 [#allocation12], 4
      %s304 = int_to_ptr.vmem [resolvable:$true] %s303
      %306 = dma.vmem_to_hbm [thread:$0]  %s304, 128, %s6, [#allocation13]
    $region49: #{tpu_custom_call.1} parent=1 // pred_fallthru
      _
    // Predicated region
    $region50: #{tpu_custom_call.1} parent=1 // pred_check
      _
    $region51: #{tpu_custom_call.1} parent=1 // pred_check_branch
      %308 = sbr.rel (0) target = $region53
    $region52: #{tpu_custom_call.1} parent=1 // pred_region
      %309 = dma.done [#allocation4], 128
    $region53: #{tpu_custom_call.1} parent=1 // pred_fallthru
      _
    // Predicated region
    $region54: #{tpu_custom_call.1} parent=1 // pred_check
      _
    $region55: #{tpu_custom_call.1} parent=1 // pred_check_branch
      %311 = sbr.rel (0) target = $region57
    $region56: #{tpu_custom_call.1} parent=1 // pred_region
      %312 = dma.done [#allocation13], 128
    $region57: #{tpu_custom_call.1} parent=1 // pred_fallthru
      _
    %313 = vsyncpa [#allocation3], 1
    %314 = vsyncpa [#allocation6], 1
    %315 = vsyncpa [#allocation9], 1
    %316 = vsyncpa [#allocation4], 1
    %317 = vsyncpa [#allocation13], 1

</llo_original>
